<compile_context>
chip_gen: v5e
topology: v5e:2x2
jax: 0.10.0
libtpu: 0.0.40
codegen_flags: <defaults>
</compile_context>

<pallas_src>
import functools

import jax
import jax.numpy as jnp
from jax.experimental import pallas as pl
from jax.experimental.pallas import tpu as pltpu


def head_kernel(x_ref, w_ref, b_ref, o_ref):
    # x_ref: [bb, K] flattened (C*H*W) feature block, K on the lane axis (multiple of 128)
    # w_ref: [1, K] fused (pool + fc + output) weight; b_ref: [1, 1] fused bias
    x = x_ref[...].astype(jnp.float32)
    w = w_ref[...]                                   # broadcast along sublanes (cheap)
    o_ref[...] = jnp.sum(x * w, axis=-1, keepdims=True) + b_ref[...]


def fuse_head_params(w1, b1, w2, b2, hw):
    """Fold avg-pool(HW) + fc(C->500) + output(500->1) into one [1, C*hw] weight + [1,1] bias.

    PyTorch Linear layout: w1 [500, C], b1 [500], w2 [1, 500], b2 [1]. Call ONCE, off the hot path.
    """
    w1t = jnp.asarray(w1, jnp.float32).T                      # [C, 500]
    w2t = jnp.asarray(w2, jnp.float32).T                      # [500, 1]
    w_c = jnp.dot(w1t, w2t)[:, 0]                             # [C]  (fc @ output fused)
    b_fused = (jnp.asarray(b1, jnp.float32) @ w2t
               + jnp.asarray(b2, jnp.float32)).reshape(1, 1)  # [1, 1]
    # Expand over spatial positions and fold the 1/HW of the mean into the weight.
    w_flat = jnp.repeat(w_c * (1.0 / hw), hw).reshape(1, -1)  # [1, C*hw], matches NCHW flatten
    return w_flat, b_fused


@functools.partial(jax.jit, static_argnames=("block_b",))
def network_head(x_nchw, w_flat, b_fused, *, block_b=64):
    """x_nchw: [B, C, H, W] backbone feature map; w_flat/b_fused from fuse_head_params."""
    B = x_nchw.shape[0]
    K = x_nchw.size // B
    x = x_nchw.reshape(B, K)  # contiguous reshape: zero-copy, no HBM round-trip

    bb = min(B, block_b)
    grid = (pl.cdiv(B, bb),)

    return pl.pallas_call(
        head_kernel,
        out_shape=jax.ShapeDtypeStruct((B, 1), jnp.float32),
        grid=grid,
        in_specs=[
            pl.BlockSpec((bb, K), lambda i: (i, 0)),  # features: streamed per batch block
            pl.BlockSpec((1, K), lambda i: (0, 0)),   # fused weight: VMEM-resident
            pl.BlockSpec((1, 1), lambda i: (0, 0)),   # fused bias
        ],
        out_specs=pl.BlockSpec((bb, 1), lambda i: (i, 0)),
        compiler_params=pltpu.CompilerParams(
            dimension_semantics=("parallel",),
            vmem_limit_bytes=40 * 1024 * 1024,
        ),
    )(x, w_flat, b_fused)


if __name__ == "__main__":
    key = jax.random.PRNGKey(0)
    k_x, k_w1, k_b1, k_w2, k_b2 = jax.random.split(key, 5)

    # Small, resnet18-consistent tail shapes: B=2, C=512, H=W=7 feature map.
    B, C, H, W = 2, 512, 7, 7
    HW = H * W
    x = jax.random.normal(k_x, (B, C, H, W), dtype=jnp.float32)

    # Deterministic parameter init (PyTorch Linear weight layout [out, in]).
    w1 = jax.random.normal(k_w1, (500, C), dtype=jnp.float32) * (1.0 / jnp.sqrt(C))
    b1 = jax.random.normal(k_b1, (500,), dtype=jnp.float32) * 0.01
    w2 = jax.random.normal(k_w2, (1, 500), dtype=jnp.float32) * (1.0 / jnp.sqrt(500.0))
    b2 = jax.random.normal(k_b2, (1,), dtype=jnp.float32) * 0.01

    # One-time weight prep (hoisted out of the per-call path).
    w_flat, b_fused = fuse_head_params(w1, b1, w2, b2, HW)
    w_flat, b_fused = jax.block_until_ready((w_flat, b_fused))

    out = network_head(x, w_flat, b_fused)
    out = jax.block_until_ready(out)

    # Pure-JAX reference (unfused, matching the PyTorch module's pool + two-Linear form).
    pooled_ref = jnp.mean(x.reshape(B, C, HW), axis=-1)
    h_ref = pooled_ref @ w1.T + b1
    out_ref = h_ref @ w2.T + b2

    assert out.shape == (B, 1)
    assert jnp.allclose(out, out_ref, atol=1e-3, rtol=1e-3), (
        jnp.max(jnp.abs(out - out_ref)))

    print("KERNEL_OK")
</pallas_src>

<mosaic_0001>
module attributes {stable_mosaic.version = 11 : i64} {
  func.func @head_kernel(%arg0: i32, %arg1: memref<2x25088xf32, #tpu.memory_space<vmem>>, %arg2: memref<1x25088xf32, #tpu.memory_space<vmem>>, %arg3: memref<1x1xf32, #tpu.memory_space<vmem>>, %arg4: memref<2x1xf32, #tpu.memory_space<vmem>>) attributes {dimension_semantics = [#tpu.dimension_semantics<parallel>], iteration_bounds = array<i64: 1>, scalar_prefetch = 0 : i64, scratch_operands = 0 : i64, tpu.core_type = #tpu.core_type<tc>, window_params = [{transform_indices = @transform_0, window_bounds = array<i64: 2, 25088>}, {pipeline_mode = #tpu.pipeline_mode<synchronous>, transform_indices = @transform_1, window_bounds = array<i64: 1, 25088>}, {pipeline_mode = #tpu.pipeline_mode<synchronous>, transform_indices = @transform_2, window_bounds = array<i64: 1, 1>}, {transform_indices = @transform_3, window_bounds = array<i64: 2, 1>}]} {
    %c0 = arith.constant 0 : index
    %c0_0 = arith.constant 0 : index
    %0 = vector.load %arg1[%c0, %c0_0] : memref<2x25088xf32, #tpu.memory_space<vmem>>, vector<2x25088xf32>
    %c0_1 = arith.constant 0 : index
    %c0_2 = arith.constant 0 : index
    %1 = vector.load %arg2[%c0_1, %c0_2] : memref<1x25088xf32, #tpu.memory_space<vmem>>, vector<1x25088xf32>
    %2 = vector.broadcast %1 : vector<1x25088xf32> to vector<2x25088xf32>
    %3 = arith.mulf %0, %2 : vector<2x25088xf32>
    %cst = arith.constant dense<0.000000e+00> : vector<2xf32>
    %4 = vector.multi_reduction <add>, %3, %cst [1] : vector<2x25088xf32> to vector<2xf32>
    %5 = vector.shape_cast %4 : vector<2xf32> to vector<2x1xf32>
    %c0_3 = arith.constant 0 : index
    %c0_4 = arith.constant 0 : index
    %6 = vector.load %arg3[%c0_3, %c0_4] : memref<1x1xf32, #tpu.memory_space<vmem>>, vector<1x1xf32>
    %7 = vector.broadcast %6 : vector<1x1xf32> to vector<2x1xf32>
    %8 = arith.addf %5, %7 : vector<2x1xf32>
    %c0_5 = arith.constant 0 : index
    %c0_6 = arith.constant 0 : index
    %9 = vector.load %arg4[%c0_5, %c0_6] : memref<2x1xf32, #tpu.memory_space<vmem>>, vector<2x1xf32>
    tpu.vector_store %arg4[%c0_5, %c0_6], %8 {strides = array<i32>} : memref<2x1xf32, #tpu.memory_space<vmem>>, vector<2x1xf32>,
    return
  }
  func.func @transform_0(%arg0: i32) -> (i32, i32) {
    %c0_i32 = arith.constant 0 : i32
    %c0_i32_0 = arith.constant 0 : i32
    return %arg0, %c0_i32 : i32, i32
  }
  func.func @transform_1(%arg0: i32) -> (i32, i32) {
    %c0_i32 = arith.constant 0 : i32
    %c0_i32_0 = arith.constant 0 : i32
    %c0_i32_1 = arith.constant 0 : i32
    return %c0_i32, %c0_i32_0 : i32, i32
  }
  func.func @transform_2(%arg0: i32) -> (i32, i32) {
    %c0_i32 = arith.constant 0 : i32
    %c0_i32_0 = arith.constant 0 : i32
    %c0_i32_1 = arith.constant 0 : i32
    return %c0_i32, %c0_i32_0 : i32, i32
  }
  func.func @transform_3(%arg0: i32) -> (i32, i32) {
    %c0_i32 = arith.constant 0 : i32
    %c0_i32_0 = arith.constant 0 : i32
    return %arg0, %c0_i32 : i32, i32
  }
}

</mosaic_0001>

<llo_original>
// kernel: network_head.1
$region0: #{network_head.1}
  #allocation0 [shape = 'u32[]', space=smem, size = 0x4, offset = 0x4, fixed_abs, tag = 'smem constant byte address 0x4 - core index']
  #allocation1 [shape = 'u32[72,128]{1,0:T(1,128)}', space=vmem, size = 0x9000, scoped, tag = 'internal scratch']
  #allocation2 [shape = 'f32[1,1]{1,0:T(1,128)S(1)}', space=vmem, size = 0x200, scoped, tag = 'scoped memory for network_head.1']
  %s0 = inlined_call_operand.vmem [shape: f32[2,25088], index: 0, kind: input, shape index: {}]
  %s1 = inlined_call_operand.vmem [shape: f32[1,25088], index: 1, kind: input, shape index: {}]
  %s2 = inlined_call_operand.<no memory space> [shape: f32[1,1], index: 2, kind: input, shape index: {}]
  %s3 = inlined_call_operand.vmem [shape: f32[2,1], index: 3, kind: output, shape index: {}]
  %s4 = sld [smem:[#allocation0]]
  $region22: #{network_head.1} parent=0
    _
  %s6 = ssub.s32 1, %s4
  %s7 = scalar_select 0, %s6, %s4
  %v8 = vstv %s2
  %9 = vst [vmem:[#allocation2] sm:$0x1] %v8
  // Predicated region
  $region2: #{network_head.1} parent=0 // pred_check
    _
  $region3: #{network_head.1} parent=0 // pred_check_branch
    %11 = sbr.rel (0) target = $region5
  $region4: #{network_head.1} parent=0 // pred_region
    _
  $region5: #{network_head.1} parent=0 // pred_fallthru
    _
  // Predicated region
  $region6: #{network_head.1} parent=0 // pred_check
    _
  $region7: #{network_head.1} parent=0 // pred_check_branch
    %13 = sbr.rel (0) target = $region9
  $region8: #{network_head.1} parent=0 // pred_region
    _
  $region9: #{network_head.1} parent=0 // pred_fallthru
    _
  // Predicated region
  $region10: #{network_head.1} parent=0 // pred_check
    _
  $region11: #{network_head.1} parent=0 // pred_check_branch
    %15 = sbr.rel (0) target = $region13
  $region12: #{network_head.1} parent=0 // pred_region
    _
  $region13: #{network_head.1} parent=0 // pred_fallthru
    _
  %v16 = vld [vmem:[%s0] sm:$0xff]
  %v17 = vld [vmem:[%s0 + $0x8] sm:$0xff]
  %v18 = vld [vmem:[%s0 + $0x10] sm:$0xff]
  %v19 = vld [vmem:[%s0 + $0x18] sm:$0xff]
  %v20 = vld [vmem:[%s0 + $0x20] sm:$0xff]
  %v21 = vld [vmem:[%s0 + $0x28] sm:$0xff]
  %v22 = vld [vmem:[%s0 + $0x30] sm:$0xff]
  %v23 = vld [vmem:[%s0 + $0x38] sm:$0xff]
  %v24 = vld [vmem:[%s0 + $0x40] sm:$0xff]
  %v25 = vld [vmem:[%s0 + $0x48] sm:$0xff]
  %v26 = vld [vmem:[%s0 + $0x50] sm:$0xff]
  %v27 = vld [vmem:[%s0 + $0x58] sm:$0xff]
  %v28 = vld [vmem:[%s0 + $0x60] sm:$0xff]
  %v29 = vld [vmem:[%s0 + $0x68] sm:$0xff]
  %v30 = vld [vmem:[%s0 + $0x70] sm:$0xff]
  %v31 = vld [vmem:[%s0 + $0x78] sm:$0xff]
  %v32 = vld [vmem:[%s0 + $0x80] sm:$0xff]
  %v33 = vld [vmem:[%s0 + $0x88] sm:$0xff]
  %v34 = vld [vmem:[%s0 + $0x90] sm:$0xff]
  %v35 = vld [vmem:[%s0 + $0x98] sm:$0xff]
  %v36 = vld [vmem:[%s0 + $0xa0] sm:$0xff]
  %v37 = vld [vmem:[%s0 + $0xa8] sm:$0xff]
  %v38 = vld [vmem:[%s0 + $0xb0] sm:$0xff]
  %v39 = vld [vmem:[%s0 + $0xb8] sm:$0xff]
  %v40 = vld [vmem:[%s0 + $0xc0] sm:$0xff]
  %v41 = vld [vmem:[%s0 + $0xc8] sm:$0xff]
  %v42 = vld [vmem:[%s0 + $0xd0] sm:$0xff]
  %v43 = vld [vmem:[%s0 + $0xd8] sm:$0xff]
  %v44 = vld [vmem:[%s0 + $0xe0] sm:$0xff]
  %v45 = vld [vmem:[%s0 + $0xe8] sm:$0xff]
  %v46 = vld [vmem:[%s0 + $0xf0] sm:$0xff]
  %v47 = vld [vmem:[%s0 + $0xf8] sm:$0xff]
  %v48 = vld [vmem:[%s0 + $0x100] sm:$0xff]
  %v49 = vld [vmem:[%s0 + $0x108] sm:$0xff]
  %v50 = vld [vmem:[%s0 + $0x110] sm:$0xff]
  %v51 = vld [vmem:[%s0 + $0x118] sm:$0xff]
  %v52 = vld [vmem:[%s0 + $0x120] sm:$0xff]
  %v53 = vld [vmem:[%s0 + $0x128] sm:$0xff]
  %v54 = vld [vmem:[%s0 + $0x130] sm:$0xff]
  %v55 = vld [vmem:[%s0 + $0x138] sm:$0xff]
  %v56 = vld [vmem:[%s0 + $0x140] sm:$0xff]
  %v57 = vld [vmem:[%s0 + $0x148] sm:$0xff]
  %v58 = vld [vmem:[%s0 + $0x150] sm:$0xff]
  %v59 = vld [vmem:[%s0 + $0x158] sm:$0xff]
  %v60 = vld [vmem:[%s0 + $0x160] sm:$0xff]
  %v61 = vld [vmem:[%s0 + $0x168] sm:$0xff]
  %v62 = vld [vmem:[%s0 + $0x170] sm:$0xff]
  %v63 = vld [vmem:[%s0 + $0x178] sm:$0xff]
  %v64 = vld [vmem:[%s0 + $0x180] sm:$0xff]
  %v65 = vld [vmem:[%s1] sm:$0xff]
  %v66 = vld [vmem:[%s1 + $0x8] sm:$0xff]
  %v67 = vld [vmem:[%s1 + $0x10] sm:$0xff]
  %v68 = vld [vmem:[%s1 + $0x18] sm:$0xff]
  %v69 = vld [vmem:[%s1 + $0x20] sm:$0xff]
  %v70 = vld [vmem:[%s1 + $0x28] sm:$0xff]
  %v71 = vld [vmem:[%s1 + $0x30] sm:$0xff]
  %v72 = vld [vmem:[%s1 + $0x38] sm:$0xff]
  %v73 = vld [vmem:[%s1 + $0x40] sm:$0xff]
  %v74 = vld [vmem:[%s1 + $0x48] sm:$0xff]
  %v75 = vld [vmem:[%s1 + $0x50] sm:$0xff]
  %v76 = vld [vmem:[%s1 + $0x58] sm:$0xff]
  %v77 = vld [vmem:[%s1 + $0x60] sm:$0xff]
  %v78 = vld [vmem:[%s1 + $0x68] sm:$0xff]
  %v79 = vld [vmem:[%s1 + $0x70] sm:$0xff]
  %v80 = vld [vmem:[%s1 + $0x78] sm:$0xff]
  %v81 = vld [vmem:[%s1 + $0x80] sm:$0xff]
  %v82 = vld [vmem:[%s1 + $0x88] sm:$0xff]
  %v83 = vld [vmem:[%s1 + $0x90] sm:$0xff]
  %v84 = vld [vmem:[%s1 + $0x98] sm:$0xff]
  %v85 = vld [vmem:[%s1 + $0xa0] sm:$0xff]
  %v86 = vld [vmem:[%s1 + $0xa8] sm:$0xff]
  %v87 = vld [vmem:[%s1 + $0xb0] sm:$0xff]
  %v88 = vld [vmem:[%s1 + $0xb8] sm:$0xff]
  %v89 = vld [vmem:[%s1 + $0xc0] sm:$0xf]
  %v115 = vperm.slane %v65, 0
  %v116 = vperm.slane %v65, 1
  %v117 = vperm.slane %v65, 2
  %v118 = vperm.slane %v65, 3
  %v119 = vperm.slane %v65, 4
  %v120 = vperm.slane %v65, 5
  %v121 = vperm.slane %v65, 6
  %v122 = vperm.slane %v65, 7
  %v123 = vperm.slane %v66, 0
  %v124 = vperm.slane %v66, 1
  %v125 = vperm.slane %v66, 2
  %v126 = vperm.slane %v66, 3
  %v127 = vperm.slane %v66, 4
  %v128 = vperm.slane %v66, 5
  %v129 = vperm.slane %v66, 6
  %v130 = vperm.slane %v66, 7
  %v131 = vperm.slane %v67, 0
  %v132 = vperm.slane %v67, 1
  %v133 = vperm.slane %v67, 2
  %v134 = vperm.slane %v67, 3
  %v135 = vperm.slane %v67, 4
  %v136 = vperm.slane %v67, 5
  %v137 = vperm.slane %v67, 6
  %v138 = vperm.slane %v67, 7
  %v139 = vperm.slane %v68, 0
  %v140 = vperm.slane %v68, 1
  %v141 = vperm.slane %v68, 2
  %v142 = vperm.slane %v68, 3
  %v143 = vperm.slane %v68, 4
  %v144 = vperm.slane %v68, 5
  %v145 = vperm.slane %v68, 6
  %v146 = vperm.slane %v68, 7
  %v147 = vperm.slane %v69, 0
  %v148 = vperm.slane %v69, 1
  %v149 = vperm.slane %v69, 2
  %v150 = vperm.slane %v69, 3
  %v151 = vperm.slane %v69, 4
  %v152 = vperm.slane %v69, 5
  %v153 = vperm.slane %v69, 6
  %v154 = vperm.slane %v69, 7
  %v155 = vperm.slane %v70, 0
  %v156 = vperm.slane %v70, 1
  %v157 = vperm.slane %v70, 2
  %v158 = vperm.slane %v70, 3
  %v159 = vperm.slane %v70, 4
  %v160 = vperm.slane %v70, 5
  %v161 = vperm.slane %v70, 6
  %v162 = vperm.slane %v70, 7
  %v163 = vperm.slane %v71, 0
  %v164 = vperm.slane %v71, 1
  %v165 = vperm.slane %v71, 2
  %v166 = vperm.slane %v71, 3
  %v167 = vperm.slane %v71, 4
  %v168 = vperm.slane %v71, 5
  %v169 = vperm.slane %v71, 6
  %v170 = vperm.slane %v71, 7
  %v171 = vperm.slane %v72, 0
  %v172 = vperm.slane %v72, 1
  %v173 = vperm.slane %v72, 2
  %v174 = vperm.slane %v72, 3
  %v175 = vperm.slane %v72, 4
  %v176 = vperm.slane %v72, 5
  %v177 = vperm.slane %v72, 6
  %v178 = vperm.slane %v72, 7
  %v179 = vperm.slane %v73, 0
  %v180 = vperm.slane %v73, 1
  %v181 = vperm.slane %v73, 2
  %v182 = vperm.slane %v73, 3
  %v183 = vperm.slane %v73, 4
  %v184 = vperm.slane %v73, 5
  %v185 = vperm.slane %v73, 6
  %v186 = vperm.slane %v73, 7
  %v187 = vperm.slane %v74, 0
  %v188 = vperm.slane %v74, 1
  %v189 = vperm.slane %v74, 2
  %v190 = vperm.slane %v74, 3
  %v191 = vperm.slane %v74, 4
  %v192 = vperm.slane %v74, 5
  %v193 = vperm.slane %v74, 6
  %v194 = vperm.slane %v74, 7
  %v195 = vperm.slane %v75, 0
  %v196 = vperm.slane %v75, 1
  %v197 = vperm.slane %v75, 2
  %v198 = vperm.slane %v75, 3
  %v199 = vperm.slane %v75, 4
  %v200 = vperm.slane %v75, 5
  %v201 = vperm.slane %v75, 6
  %v202 = vperm.slane %v75, 7
  %v203 = vperm.slane %v76, 0
  %v204 = vperm.slane %v76, 1
  %v205 = vperm.slane %v76, 2
  %v206 = vperm.slane %v76, 3
  %v207 = vperm.slane %v76, 4
  %v208 = vperm.slane %v76, 5
  %v209 = vperm.slane %v76, 6
  %v210 = vperm.slane %v76, 7
  %v211 = vperm.slane %v77, 0
  %v212 = vperm.slane %v77, 1
  %v213 = vperm.slane %v77, 2
  %v214 = vperm.slane %v77, 3
  %v215 = vperm.slane %v77, 4
  %v216 = vperm.slane %v77, 5
  %v217 = vperm.slane %v77, 6
  %v218 = vperm.slane %v77, 7
  %v219 = vperm.slane %v78, 0
  %v220 = vperm.slane %v78, 1
  %v221 = vperm.slane %v78, 2
  %v222 = vperm.slane %v78, 3
  %v223 = vperm.slane %v78, 4
  %v224 = vperm.slane %v78, 5
  %v225 = vperm.slane %v78, 6
  %v226 = vperm.slane %v78, 7
  %v227 = vperm.slane %v79, 0
  %v228 = vperm.slane %v79, 1
  %v229 = vperm.slane %v79, 2
  %v230 = vperm.slane %v79, 3
  %v231 = vperm.slane %v79, 4
  %v232 = vperm.slane %v79, 5
  %v233 = vperm.slane %v79, 6
  %v234 = vperm.slane %v79, 7
  %v235 = vperm.slane %v80, 0
  %v236 = vperm.slane %v80, 1
  %v237 = vperm.slane %v80, 2
  %v238 = vperm.slane %v80, 3
  %v239 = vperm.slane %v80, 4
  %v240 = vperm.slane %v80, 5
  %v241 = vperm.slane %v80, 6
  %v242 = vperm.slane %v80, 7
  %v243 = vperm.slane %v81, 0
  %v244 = vperm.slane %v81, 1
  %v245 = vperm.slane %v81, 2
  %v246 = vperm.slane %v81, 3
  %v247 = vperm.slane %v81, 4
  %v248 = vperm.slane %v81, 5
  %v249 = vperm.slane %v81, 6
  %v250 = vperm.slane %v81, 7
  %v251 = vperm.slane %v82, 0
  %v252 = vperm.slane %v82, 1
  %v253 = vperm.slane %v82, 2
  %v254 = vperm.slane %v82, 3
  %v255 = vperm.slane %v82, 4
  %v256 = vperm.slane %v82, 5
  %v257 = vperm.slane %v82, 6
  %v258 = vperm.slane %v82, 7
  %v259 = vperm.slane %v83, 0
  %v260 = vperm.slane %v83, 1
  %v261 = vperm.slane %v83, 2
  %v262 = vperm.slane %v83, 3
  %v263 = vperm.slane %v83, 4
  %v264 = vperm.slane %v83, 5
  %v265 = vperm.slane %v83, 6
  %v266 = vperm.slane %v83, 7
  %v267 = vperm.slane %v84, 0
  %v268 = vperm.slane %v84, 1
  %v269 = vperm.slane %v84, 2
  %v270 = vperm.slane %v84, 3
  %v271 = vperm.slane %v84, 4
  %v272 = vperm.slane %v84, 5
  %v273 = vperm.slane %v84, 6
  %v274 = vperm.slane %v84, 7
  %v275 = vperm.slane %v85, 0
  %v276 = vperm.slane %v85, 1
  %v277 = vperm.slane %v85, 2
  %v278 = vperm.slane %v85, 3
  %v279 = vperm.slane %v85, 4
  %v280 = vperm.slane %v85, 5
  %v281 = vperm.slane %v85, 6
  %v282 = vperm.slane %v85, 7
  %v283 = vperm.slane %v86, 0
  %v284 = vperm.slane %v86, 1
  %v285 = vperm.slane %v86, 2
  %v286 = vperm.slane %v86, 3
  %v287 = vperm.slane %v86, 4
  %v288 = vperm.slane %v86, 5
  %v289 = vperm.slane %v86, 6
  %v290 = vperm.slane %v86, 7
  %v291 = vperm.slane %v87, 0
  %v292 = vperm.slane %v87, 1
  %v293 = vperm.slane %v87, 2
  %v294 = vperm.slane %v87, 3
  %v295 = vperm.slane %v87, 4
  %v296 = vperm.slane %v87, 5
  %v297 = vperm.slane %v87, 6
  %v298 = vperm.slane %v87, 7
  %v299 = vperm.slane %v88, 0
  %v300 = vperm.slane %v88, 1
  %v301 = vperm.slane %v88, 2
  %v302 = vperm.slane %v88, 3
  %v303 = vperm.slane %v88, 4
  %v304 = vperm.slane %v88, 5
  %v305 = vperm.slane %v88, 6
  %v306 = vperm.slane %v88, 7
  %v307 = vperm.slane %v89, 0
  %v308 = vperm.slane %v89, 1
  %v309 = vperm.slane %v89, 2
  %v310 = vperm.slane %v89, 3
  %v311 = vrot.slane %v116, 6
  %v312 = vrot.slane %v117, 4
  %v313 = vrot.slane %v118, 2
  %v314 = vrot.slane %v120, 6
  %v315 = vrot.slane %v121, 4
  %v316 = vrot.slane %v122, 2
  %v317 = vrot.slane %v124, 6
  %v318 = vrot.slane %v125, 4
  %v319 = vrot.slane %v126, 2
  %v320 = vrot.slane %v128, 6
  %v321 = vrot.slane %v129, 4
  %v322 = vrot.slane %v130, 2
  %v323 = vrot.slane %v132, 6
  %v324 = vrot.slane %v133, 4
  %v325 = vrot.slane %v134, 2
  %v326 = vrot.slane %v136, 6
  %v327 = vrot.slane %v137, 4
  %v328 = vrot.slane %v138, 2
  %v329 = vrot.slane %v140, 6
  %v330 = vrot.slane %v141, 4
  %v331 = vrot.slane %v142, 2
  %v332 = vrot.slane %v144, 6
  %v333 = vrot.slane %v145, 4
  %v334 = vrot.slane %v146, 2
  %v335 = vrot.slane %v148, 6
  %v336 = vrot.slane %v149, 4
  %v337 = vrot.slane %v150, 2
  %v338 = vrot.slane %v152, 6
  %v339 = vrot.slane %v153, 4
  %v340 = vrot.slane %v154, 2
  %v341 = vrot.slane %v156, 6
  %v342 = vrot.slane %v157, 4
  %v343 = vrot.slane %v158, 2
  %v344 = vrot.slane %v160, 6
  %v345 = vrot.slane %v161, 4
  %v346 = vrot.slane %v162, 2
  %v347 = vrot.slane %v164, 6
  %v348 = vrot.slane %v165, 4
  %v349 = vrot.slane %v166, 2
  %v350 = vrot.slane %v168, 6
  %v351 = vrot.slane %v169, 4
  %v352 = vrot.slane %v170, 2
  %v353 = vrot.slane %v172, 6
  %v354 = vrot.slane %v173, 4
  %v355 = vrot.slane %v174, 2
  %v356 = vrot.slane %v176, 6
  %v357 = vrot.slane %v177, 4
  %v358 = vrot.slane %v178, 2
  %v359 = vrot.slane %v180, 6
  %v360 = vrot.slane %v181, 4
  %v361 = vrot.slane %v182, 2
  %v362 = vrot.slane %v184, 6
  %v363 = vrot.slane %v185, 4
  %v364 = vrot.slane %v186, 2
  %v365 = vrot.slane %v188, 6
  %v366 = vrot.slane %v189, 4
  %v367 = vrot.slane %v190, 2
  %v368 = vrot.slane %v192, 6
  %v369 = vrot.slane %v193, 4
  %v370 = vrot.slane %v194, 2
  %v371 = vrot.slane %v196, 6
  %v372 = vrot.slane %v197, 4
  %v373 = vrot.slane %v198, 2
  %v374 = vrot.slane %v200, 6
  %v375 = vrot.slane %v201, 4
  %v376 = vrot.slane %v202, 2
  %v377 = vrot.slane %v204, 6
  %v378 = vrot.slane %v205, 4
  %v379 = vrot.slane %v206, 2
  %v380 = vrot.slane %v208, 6
  %v381 = vrot.slane %v209, 4
  %v382 = vrot.slane %v210, 2
  %v383 = vrot.slane %v212, 6
  %v384 = vrot.slane %v213, 4
  %v385 = vrot.slane %v214, 2
  %v386 = vrot.slane %v216, 6
  %v387 = vrot.slane %v217, 4
  %v388 = vrot.slane %v218, 2
  %v389 = vrot.slane %v220, 6
  %v390 = vrot.slane %v221, 4
  %v391 = vrot.slane %v222, 2
  %v392 = vrot.slane %v224, 6
  %v393 = vrot.slane %v225, 4
  %v394 = vrot.slane %v226, 2
  %v395 = vrot.slane %v228, 6
  %v396 = vrot.slane %v229, 4
  %v397 = vrot.slane %v230, 2
  %v398 = vrot.slane %v232, 6
  %v399 = vrot.slane %v233, 4
  %v400 = vrot.slane %v234, 2
  %v401 = vrot.slane %v236, 6
  %v402 = vrot.slane %v237, 4
  %v403 = vrot.slane %v238, 2
  %v404 = vrot.slane %v240, 6
  %v405 = vrot.slane %v241, 4
  %v406 = vrot.slane %v242, 2
  %v407 = vrot.slane %v244, 6
  %v408 = vrot.slane %v245, 4
  %v409 = vrot.slane %v246, 2
  %v410 = vrot.slane %v248, 6
  %v411 = vrot.slane %v249, 4
  %v412 = vrot.slane %v250, 2
  %v413 = vrot.slane %v252, 6
  %v414 = vrot.slane %v253, 4
  %v415 = vrot.slane %v254, 2
  %v416 = vrot.slane %v256, 6
  %v417 = vrot.slane %v257, 4
  %v418 = vrot.slane %v258, 2
  %v419 = vrot.slane %v260, 6
  %v420 = vrot.slane %v261, 4
  %v421 = vrot.slane %v262, 2
  %v422 = vrot.slane %v264, 6
  %v423 = vrot.slane %v265, 4
  %v424 = vrot.slane %v266, 2
  %v425 = vrot.slane %v268, 6
  %v426 = vrot.slane %v269, 4
  %v427 = vrot.slane %v270, 2
  %v428 = vrot.slane %v272, 6
  %v429 = vrot.slane %v273, 4
  %v430 = vrot.slane %v274, 2
  %v431 = vrot.slane %v276, 6
  %v432 = vrot.slane %v277, 4
  %v433 = vrot.slane %v278, 2
  %v434 = vrot.slane %v280, 6
  %v435 = vrot.slane %v281, 4
  %v436 = vrot.slane %v282, 2
  %v437 = vrot.slane %v284, 6
  %v438 = vrot.slane %v285, 4
  %v439 = vrot.slane %v286, 2
  %v440 = vrot.slane %v288, 6
  %v441 = vrot.slane %v289, 4
  %v442 = vrot.slane %v290, 2
  %v443 = vrot.slane %v292, 6
  %v444 = vrot.slane %v293, 4
  %v445 = vrot.slane %v294, 2
  %v446 = vrot.slane %v296, 6
  %v447 = vrot.slane %v297, 4
  %v448 = vrot.slane %v298, 2
  %v449 = vrot.slane %v300, 6
  %v450 = vrot.slane %v301, 4
  %v451 = vrot.slane %v302, 2
  %v452 = vrot.slane %v304, 6
  %v453 = vrot.slane %v305, 4
  %v454 = vrot.slane %v306, 2
  %v455 = vrot.slane %v308, 6
  %v456 = vrot.slane %v309, 4
  %v457 = vrot.slane %v310, 2
  %vm458 = vcmask 1041408
  %v459 = vsel %vm458, %v115, %v311
  %vm460 = vcmask 1045508
  %v461 = vsel %vm460, %v312, %v313
  %vm462 = vcmask 1043456
  %v463 = vsel %vm462, %v459, %v461
  %v464 = vsel %vm458, %v119, %v314
  %v465 = vsel %vm460, %v315, %v316
  %v466 = vsel %vm462, %v464, %v465
  %v467 = vsel %vm458, %v123, %v317
  %v468 = vsel %vm460, %v318, %v319
  %v469 = vsel %vm462, %v467, %v468
  %v470 = vsel %vm458, %v127, %v320
  %v471 = vsel %vm460, %v321, %v322
  %v472 = vsel %vm462, %v470, %v471
  %v473 = vsel %vm458, %v131, %v323
  %v474 = vsel %vm460, %v324, %v325
  %v475 = vsel %vm462, %v473, %v474
  %v476 = vsel %vm458, %v135, %v326
  %v477 = vsel %vm460, %v327, %v328
  %v478 = vsel %vm462, %v476, %v477
  %v479 = vsel %vm458, %v139, %v329
  %v480 = vsel %vm460, %v330, %v331
  %v481 = vsel %vm462, %v479, %v480
  %v482 = vsel %vm458, %v143, %v332
  %v483 = vsel %vm460, %v333, %v334
  %v484 = vsel %vm462, %v482, %v483
  %v485 = vsel %vm458, %v147, %v335
  %v486 = vsel %vm460, %v336, %v337
  %v487 = vsel %vm462, %v485, %v486
  %v488 = vsel %vm458, %v151, %v338
  %v489 = vsel %vm460, %v339, %v340
  %v490 = vsel %vm462, %v488, %v489
  %v491 = vsel %vm458, %v155, %v341
  %v492 = vsel %vm460, %v342, %v343
  %v493 = vsel %vm462, %v491, %v492
  %v494 = vsel %vm458, %v159, %v344
  %v495 = vsel %vm460, %v345, %v346
  %v496 = vsel %vm462, %v494, %v495
  %v497 = vsel %vm458, %v163, %v347
  %v498 = vsel %vm460, %v348, %v349
  %v499 = vsel %vm462, %v497, %v498
  %v500 = vsel %vm458, %v167, %v350
  %v501 = vsel %vm460, %v351, %v352
  %v502 = vsel %vm462, %v500, %v501
  %v503 = vsel %vm458, %v171, %v353
  %v504 = vsel %vm460, %v354, %v355
  %v505 = vsel %vm462, %v503, %v504
  %v506 = vsel %vm458, %v175, %v356
  %v507 = vsel %vm460, %v357, %v358
  %v508 = vsel %vm462, %v506, %v507
  %v509 = vsel %vm458, %v179, %v359
  %v510 = vsel %vm460, %v360, %v361
  %v511 = vsel %vm462, %v509, %v510
  %v512 = vsel %vm458, %v183, %v362
  %v513 = vsel %vm460, %v363, %v364
  %v514 = vsel %vm462, %v512, %v513
  %v515 = vsel %vm458, %v187, %v365
  %v516 = vsel %vm460, %v366, %v367
  %v517 = vsel %vm462, %v515, %v516
  %v518 = vsel %vm458, %v191, %v368
  %v519 = vsel %vm460, %v369, %v370
  %v520 = vsel %vm462, %v518, %v519
  %v521 = vsel %vm458, %v195, %v371
  %v522 = vsel %vm460, %v372, %v373
  %v523 = vsel %vm462, %v521, %v522
  %v524 = vsel %vm458, %v199, %v374
  %v525 = vsel %vm460, %v375, %v376
  %v526 = vsel %vm462, %v524, %v525
  %v527 = vsel %vm458, %v203, %v377
  %v528 = vsel %vm460, %v378, %v379
  %v529 = vsel %vm462, %v527, %v528
  %v530 = vsel %vm458, %v207, %v380
  %v531 = vsel %vm460, %v381, %v382
  %v532 = vsel %vm462, %v530, %v531
  %v533 = vsel %vm458, %v211, %v383
  %v534 = vsel %vm460, %v384, %v385
  %v535 = vsel %vm462, %v533, %v534
  %v536 = vsel %vm458, %v215, %v386
  %v537 = vsel %vm460, %v387, %v388
  %v538 = vsel %vm462, %v536, %v537
  %v539 = vsel %vm458, %v219, %v389
  %v540 = vsel %vm460, %v390, %v391
  %v541 = vsel %vm462, %v539, %v540
  %v542 = vsel %vm458, %v223, %v392
  %v543 = vsel %vm460, %v393, %v394
  %v544 = vsel %vm462, %v542, %v543
  %v545 = vsel %vm458, %v227, %v395
  %v546 = vsel %vm460, %v396, %v397
  %v547 = vsel %vm462, %v545, %v546
  %v548 = vsel %vm458, %v231, %v398
  %v549 = vsel %vm460, %v399, %v400
  %v550 = vsel %vm462, %v548, %v549
  %v551 = vsel %vm458, %v235, %v401
  %v552 = vsel %vm460, %v402, %v403
  %v553 = vsel %vm462, %v551, %v552
  %v554 = vsel %vm458, %v239, %v404
  %v555 = vsel %vm460, %v405, %v406
  %v556 = vsel %vm462, %v554, %v555
  %v557 = vsel %vm458, %v243, %v407
  %v558 = vsel %vm460, %v408, %v409
  %v559 = vsel %vm462, %v557, %v558
  %v560 = vsel %vm458, %v247, %v410
  %v561 = vsel %vm460, %v411, %v412
  %v562 = vsel %vm462, %v560, %v561
  %v563 = vsel %vm458, %v251, %v413
  %v564 = vsel %vm460, %v414, %v415
  %v565 = vsel %vm462, %v563, %v564
  %v566 = vsel %vm458, %v255, %v416
  %v567 = vsel %vm460, %v417, %v418
  %v568 = vsel %vm462, %v566, %v567
  %v569 = vsel %vm458, %v259, %v419
  %v570 = vsel %vm460, %v420, %v421
  %v571 = vsel %vm462, %v569, %v570
  %v572 = vsel %vm458, %v263, %v422
  %v573 = vsel %vm460, %v423, %v424
  %v574 = vsel %vm462, %v572, %v573
  %v575 = vsel %vm458, %v267, %v425
  %v576 = vsel %vm460, %v426, %v427
  %v577 = vsel %vm462, %v575, %v576
  %v578 = vsel %vm458, %v271, %v428
  %v579 = vsel %vm460, %v429, %v430
  %v580 = vsel %vm462, %v578, %v579
  %v581 = vsel %vm458, %v275, %v431
  %v582 = vsel %vm460, %v432, %v433
  %v583 = vsel %vm462, %v581, %v582
  %v584 = vsel %vm458, %v279, %v434
  %v585 = vsel %vm460, %v435, %v436
  %v586 = vsel %vm462, %v584, %v585
  %v587 = vsel %vm458, %v283, %v437
  %v588 = vsel %vm460, %v438, %v439
  %v589 = vsel %vm462, %v587, %v588
  %v590 = vsel %vm458, %v287, %v440
  %v591 = vsel %vm460, %v441, %v442
  %v592 = vsel %vm462, %v590, %v591
  %v593 = vsel %vm458, %v291, %v443
  %v594 = vsel %vm460, %v444, %v445
  %v595 = vsel %vm462, %v593, %v594
  %v596 = vsel %vm458, %v295, %v446
  %v597 = vsel %vm460, %v447, %v448
  %v598 = vsel %vm462, %v596, %v597
  %v599 = vsel %vm458, %v299, %v449
  %v600 = vsel %vm460, %v450, %v451
  %v601 = vsel %vm462, %v599, %v600
  %v602 = vsel %vm458, %v303, %v452
  %v603 = vsel %vm460, %v453, %v454
  %v604 = vsel %vm462, %v602, %v603
  %v605 = vsel %vm458, %v307, %v455
  %v606 = vsel %vm460, %v456, %v457
  %v607 = vsel %vm462, %v605, %v606
  %v657 = vmul.f32 %v16, %v463
  %v658 = vmul.f32 %v17, %v466
  %v659 = vmul.f32 %v18, %v469
  %v660 = vmul.f32 %v19, %v472
  %v661 = vmul.f32 %v20, %v475
  %v662 = vmul.f32 %v21, %v478
  %v663 = vmul.f32 %v22, %v481
  %v664 = vmul.f32 %v23, %v484
  %v665 = vmul.f32 %v24, %v487
  %v666 = vmul.f32 %v25, %v490
  %v667 = vmul.f32 %v26, %v493
  %v668 = vmul.f32 %v27, %v496
  %v669 = vmul.f32 %v28, %v499
  %v670 = vmul.f32 %v29, %v502
  %v671 = vmul.f32 %v30, %v505
  %v672 = vmul.f32 %v31, %v508
  %v673 = vmul.f32 %v32, %v511
  %v674 = vmul.f32 %v33, %v514
  %v675 = vmul.f32 %v34, %v517
  %v676 = vmul.f32 %v35, %v520
  %v677 = vmul.f32 %v36, %v523
  %v678 = vmul.f32 %v37, %v526
  %v679 = vmul.f32 %v38, %v529
  %v680 = vmul.f32 %v39, %v532
  %v681 = vmul.f32 %v40, %v535
  %v682 = vmul.f32 %v41, %v538
  %v683 = vmul.f32 %v42, %v541
  %v684 = vmul.f32 %v43, %v544
  %v685 = vmul.f32 %v44, %v547
  %v686 = vmul.f32 %v45, %v550
  %v687 = vmul.f32 %v46, %v553
  %v688 = vmul.f32 %v47, %v556
  %v689 = vmul.f32 %v48, %v559
  %v690 = vmul.f32 %v49, %v562
  %v691 = vmul.f32 %v50, %v565
  %v692 = vmul.f32 %v51, %v568
  %v693 = vmul.f32 %v52, %v571
  %v694 = vmul.f32 %v53, %v574
  %v695 = vmul.f32 %v54, %v577
  %v696 = vmul.f32 %v55, %v580
  %v697 = vmul.f32 %v56, %v583
  %v698 = vmul.f32 %v57, %v586
  %v699 = vmul.f32 %v58, %v589
  %v700 = vmul.f32 %v59, %v592
  %v701 = vmul.f32 %v60, %v595
  %v702 = vmul.f32 %v61, %v598
  %v703 = vmul.f32 %v62, %v601
  %v704 = vmul.f32 %v63, %v604
  %v705 = vmul.f32 %v64, %v607
  %755 = vst [vmem:[#allocation1] ss:$4 sm:$0xff] %v657
  %s756 = scalar_lea.vmem [#allocation1], 32
  %757 = vst [vmem:[%s756] ss:$4 sm:$0xff] %v658
  %v758 = vld.sshfl [vmem:[#allocation1] sm:$0xff pattern:$0x73625140]
  %v759 = vld.sshfl [vmem:[#allocation1 + $0x8] sm:$0xff pattern:$0x73625140]
  %v760 = vld.sshfl [vmem:[#allocation1 + $0x10] sm:$0xff pattern:$0x73625140]
  %v761 = vld.sshfl [vmem:[#allocation1 + $0x18] sm:$0xff pattern:$0x73625140]
  %v762 = vld.sshfl [vmem:[#allocation1 + $0x20] sm:$0xff pattern:$0x73625140]
  %v763 = vld.sshfl [vmem:[#allocation1 + $0x28] sm:$0xff pattern:$0x73625140]
  %v764 = vld.sshfl [vmem:[#allocation1 + $0x30] sm:$0xff pattern:$0x73625140]
  %v765 = vld.sshfl [vmem:[#allocation1 + $0x38] sm:$0xff pattern:$0x73625140]
  %766 = vst [vmem:[#allocation1] ss:$4 sm:$0xff] %v659
  %767 = vst [vmem:[%s756] ss:$4 sm:$0xff] %v660
  %v768 = vld.sshfl [vmem:[#allocation1] sm:$0xff pattern:$0x73625140]
  %v769 = vld.sshfl [vmem:[#allocation1 + $0x8] sm:$0xff pattern:$0x73625140]
  %v770 = vld.sshfl [vmem:[#allocation1 + $0x10] sm:$0xff pattern:$0x73625140]
  %v771 = vld.sshfl [vmem:[#allocation1 + $0x18] sm:$0xff pattern:$0x73625140]
  %v772 = vld.sshfl [vmem:[#allocation1 + $0x20] sm:$0xff pattern:$0x73625140]
  %v773 = vld.sshfl [vmem:[#allocation1 + $0x28] sm:$0xff pattern:$0x73625140]
  %v774 = vld.sshfl [vmem:[#allocation1 + $0x30] sm:$0xff pattern:$0x73625140]
  %v775 = vld.sshfl [vmem:[#allocation1 + $0x38] sm:$0xff pattern:$0x73625140]
  %776 = vst [vmem:[#allocation1] ss:$4 sm:$0xff] %v661
  %777 = vst [vmem:[%s756] ss:$4 sm:$0xff] %v662
  %v778 = vld.sshfl [vmem:[#allocation1] sm:$0xff pattern:$0x73625140]
  %v779 = vld.sshfl [vmem:[#allocation1 + $0x8] sm:$0xff pattern:$0x73625140]
  %v780 = vld.sshfl [vmem:[#allocation1 + $0x10] sm:$0xff pattern:$0x73625140]
  %v781 = vld.sshfl [vmem:[#allocation1 + $0x18] sm:$0xff pattern:$0x73625140]
  %v782 = vld.sshfl [vmem:[#allocation1 + $0x20] sm:$0xff pattern:$0x73625140]
  %v783 = vld.sshfl [vmem:[#allocation1 + $0x28] sm:$0xff pattern:$0x73625140]
  %v784 = vld.sshfl [vmem:[#allocation1 + $0x30] sm:$0xff pattern:$0x73625140]
  %v785 = vld.sshfl [vmem:[#allocation1 + $0x38] sm:$0xff pattern:$0x73625140]
  %786 = vst [vmem:[#allocation1] ss:$4 sm:$0xff] %v663
  %787 = vst [vmem:[%s756] ss:$4 sm:$0xff] %v664
  %v788 = vld.sshfl [vmem:[#allocation1] sm:$0xff pattern:$0x73625140]
  %v789 = vld.sshfl [vmem:[#allocation1 + $0x8] sm:$0xff pattern:$0x73625140]
  %v790 = vld.sshfl [vmem:[#allocation1 + $0x10] sm:$0xff pattern:$0x73625140]
  %v791 = vld.sshfl [vmem:[#allocation1 + $0x18] sm:$0xff pattern:$0x73625140]
  %v792 = vld.sshfl [vmem:[#allocation1 + $0x20] sm:$0xff pattern:$0x73625140]
  %v793 = vld.sshfl [vmem:[#allocation1 + $0x28] sm:$0xff pattern:$0x73625140]
  %v794 = vld.sshfl [vmem:[#allocation1 + $0x30] sm:$0xff pattern:$0x73625140]
  %v795 = vld.sshfl [vmem:[#allocation1 + $0x38] sm:$0xff pattern:$0x73625140]
  %796 = vst [vmem:[#allocation1] ss:$4 sm:$0xff] %v665
  %797 = vst [vmem:[%s756] ss:$4 sm:$0xff] %v666
  %v798 = vld.sshfl [vmem:[#allocation1] sm:$0xff pattern:$0x73625140]
  %v799 = vld.sshfl [vmem:[#allocation1 + $0x8] sm:$0xff pattern:$0x73625140]
  %v800 = vld.sshfl [vmem:[#allocation1 + $0x10] sm:$0xff pattern:$0x73625140]
  %v801 = vld.sshfl [vmem:[#allocation1 + $0x18] sm:$0xff pattern:$0x73625140]
  %v802 = vld.sshfl [vmem:[#allocation1 + $0x20] sm:$0xff pattern:$0x73625140]
  %v803 = vld.sshfl [vmem:[#allocation1 + $0x28] sm:$0xff pattern:$0x73625140]
  %v804 = vld.sshfl [vmem:[#allocation1 + $0x30] sm:$0xff pattern:$0x73625140]
  %v805 = vld.sshfl [vmem:[#allocation1 + $0x38] sm:$0xff pattern:$0x73625140]
  %806 = vst [vmem:[#allocation1] ss:$4 sm:$0xff] %v667
  %807 = vst [vmem:[%s756] ss:$4 sm:$0xff] %v668
  %v808 = vld.sshfl [vmem:[#allocation1] sm:$0xff pattern:$0x73625140]
  %v809 = vld.sshfl [vmem:[#allocation1 + $0x8] sm:$0xff pattern:$0x73625140]
  %v810 = vld.sshfl [vmem:[#allocation1 + $0x10] sm:$0xff pattern:$0x73625140]
  %v811 = vld.sshfl [vmem:[#allocation1 + $0x18] sm:$0xff pattern:$0x73625140]
  %v812 = vld.sshfl [vmem:[#allocation1 + $0x20] sm:$0xff pattern:$0x73625140]
  %v813 = vld.sshfl [vmem:[#allocation1 + $0x28] sm:$0xff pattern:$0x73625140]
  %v814 = vld.sshfl [vmem:[#allocation1 + $0x30] sm:$0xff pattern:$0x73625140]
  %v815 = vld.sshfl [vmem:[#allocation1 + $0x38] sm:$0xff pattern:$0x73625140]
  %816 = vst [vmem:[#allocation1] ss:$4 sm:$0xff] %v669
  %817 = vst [vmem:[%s756] ss:$4 sm:$0xff] %v670
  %v818 = vld.sshfl [vmem:[#allocation1] sm:$0xff pattern:$0x73625140]
  %v819 = vld.sshfl [vmem:[#allocation1 + $0x8] sm:$0xff pattern:$0x73625140]
  %v820 = vld.sshfl [vmem:[#allocation1 + $0x10] sm:$0xff pattern:$0x73625140]
  %v821 = vld.sshfl [vmem:[#allocation1 + $0x18] sm:$0xff pattern:$0x73625140]
  %v822 = vld.sshfl [vmem:[#allocation1 + $0x20] sm:$0xff pattern:$0x73625140]
  %v823 = vld.sshfl [vmem:[#allocation1 + $0x28] sm:$0xff pattern:$0x73625140]
  %v824 = vld.sshfl [vmem:[#allocation1 + $0x30] sm:$0xff pattern:$0x73625140]
  %v825 = vld.sshfl [vmem:[#allocation1 + $0x38] sm:$0xff pattern:$0x73625140]
  %826 = vst [vmem:[#allocation1] ss:$4 sm:$0xff] %v671
  %827 = vst [vmem:[%s756] ss:$4 sm:$0xff] %v672
  %v828 = vld.sshfl [vmem:[#allocation1] sm:$0xff pattern:$0x73625140]
  %v829 = vld.sshfl [vmem:[#allocation1 + $0x8] sm:$0xff pattern:$0x73625140]
  %v830 = vld.sshfl [vmem:[#allocation1 + $0x10] sm:$0xff pattern:$0x73625140]
  %v831 = vld.sshfl [vmem:[#allocation1 + $0x18] sm:$0xff pattern:$0x73625140]
  %v832 = vld.sshfl [vmem:[#allocation1 + $0x20] sm:$0xff pattern:$0x73625140]
  %v833 = vld.sshfl [vmem:[#allocation1 + $0x28] sm:$0xff pattern:$0x73625140]
  %v834 = vld.sshfl [vmem:[#allocation1 + $0x30] sm:$0xff pattern:$0x73625140]
  %v835 = vld.sshfl [vmem:[#allocation1 + $0x38] sm:$0xff pattern:$0x73625140]
  %836 = vst [vmem:[#allocation1] ss:$4 sm:$0xff] %v673
  %837 = vst [vmem:[%s756] ss:$4 sm:$0xff] %v674
  %v838 = vld.sshfl [vmem:[#allocation1] sm:$0xff pattern:$0x73625140]
  %v839 = vld.sshfl [vmem:[#allocation1 + $0x8] sm:$0xff pattern:$0x73625140]
  %v840 = vld.sshfl [vmem:[#allocation1 + $0x10] sm:$0xff pattern:$0x73625140]
  %v841 = vld.sshfl [vmem:[#allocation1 + $0x18] sm:$0xff pattern:$0x73625140]
  %v842 = vld.sshfl [vmem:[#allocation1 + $0x20] sm:$0xff pattern:$0x73625140]
  %v843 = vld.sshfl [vmem:[#allocation1 + $0x28] sm:$0xff pattern:$0x73625140]
  %v844 = vld.sshfl [vmem:[#allocation1 + $0x30] sm:$0xff pattern:$0x73625140]
  %v845 = vld.sshfl [vmem:[#allocation1 + $0x38] sm:$0xff pattern:$0x73625140]
  %846 = vst [vmem:[#allocation1] ss:$4 sm:$0xff] %v675
  %847 = vst [vmem:[%s756] ss:$4 sm:$0xff] %v676
  %v848 = vld.sshfl [vmem:[#allocation1] sm:$0xff pattern:$0x73625140]
  %v849 = vld.sshfl [vmem:[#allocation1 + $0x8] sm:$0xff pattern:$0x73625140]
  %v850 = vld.sshfl [vmem:[#allocation1 + $0x10] sm:$0xff pattern:$0x73625140]
  %v851 = vld.sshfl [vmem:[#allocation1 + $0x18] sm:$0xff pattern:$0x73625140]
  %v852 = vld.sshfl [vmem:[#allocation1 + $0x20] sm:$0xff pattern:$0x73625140]
  %v853 = vld.sshfl [vmem:[#allocation1 + $0x28] sm:$0xff pattern:$0x73625140]
  %v854 = vld.sshfl [vmem:[#allocation1 + $0x30] sm:$0xff pattern:$0x73625140]
  %v855 = vld.sshfl [vmem:[#allocation1 + $0x38] sm:$0xff pattern:$0x73625140]
  %856 = vst [vmem:[#allocation1] ss:$4 sm:$0xff] %v677
  %857 = vst [vmem:[%s756] ss:$4 sm:$0xff] %v678
  %v858 = vld.sshfl [vmem:[#allocation1] sm:$0xff pattern:$0x73625140]
  %v859 = vld.sshfl [vmem:[#allocation1 + $0x8] sm:$0xff pattern:$0x73625140]
  %v860 = vld.sshfl [vmem:[#allocation1 + $0x10] sm:$0xff pattern:$0x73625140]
  %v861 = vld.sshfl [vmem:[#allocation1 + $0x18] sm:$0xff pattern:$0x73625140]
  %v862 = vld.sshfl [vmem:[#allocation1 + $0x20] sm:$0xff pattern:$0x73625140]
  %v863 = vld.sshfl [vmem:[#allocation1 + $0x28] sm:$0xff pattern:$0x73625140]
  %v864 = vld.sshfl [vmem:[#allocation1 + $0x30] sm:$0xff pattern:$0x73625140]
  %v865 = vld.sshfl [vmem:[#allocation1 + $0x38] sm:$0xff pattern:$0x73625140]
  %866 = vst [vmem:[#allocation1] ss:$4 sm:$0xff] %v679
  %867 = vst [vmem:[%s756] ss:$4 sm:$0xff] %v680
  %v868 = vld.sshfl [vmem:[#allocation1] sm:$0xff pattern:$0x73625140]
  %v869 = vld.sshfl [vmem:[#allocation1 + $0x8] sm:$0xff pattern:$0x73625140]
  %v870 = vld.sshfl [vmem:[#allocation1 + $0x10] sm:$0xff pattern:$0x73625140]
  %v871 = vld.sshfl [vmem:[#allocation1 + $0x18] sm:$0xff pattern:$0x73625140]
  %v872 = vld.sshfl [vmem:[#allocation1 + $0x20] sm:$0xff pattern:$0x73625140]
  %v873 = vld.sshfl [vmem:[#allocation1 + $0x28] sm:$0xff pattern:$0x73625140]
  %v874 = vld.sshfl [vmem:[#allocation1 + $0x30] sm:$0xff pattern:$0x73625140]
  %v875 = vld.sshfl [vmem:[#allocation1 + $0x38] sm:$0xff pattern:$0x73625140]
  %876 = vst [vmem:[#allocation1] ss:$4 sm:$0xff] %v681
  %877 = vst [vmem:[%s756] ss:$4 sm:$0xff] %v682
  %v878 = vld.sshfl [vmem:[#allocation1] sm:$0xff pattern:$0x73625140]
  %v879 = vld.sshfl [vmem:[#allocation1 + $0x8] sm:$0xff pattern:$0x73625140]
  %v880 = vld.sshfl [vmem:[#allocation1 + $0x10] sm:$0xff pattern:$0x73625140]
  %v881 = vld.sshfl [vmem:[#allocation1 + $0x18] sm:$0xff pattern:$0x73625140]
  %v882 = vld.sshfl [vmem:[#allocation1 + $0x20] sm:$0xff pattern:$0x73625140]
  %v883 = vld.sshfl [vmem:[#allocation1 + $0x28] sm:$0xff pattern:$0x73625140]
  %v884 = vld.sshfl [vmem:[#allocation1 + $0x30] sm:$0xff pattern:$0x73625140]
  %v885 = vld.sshfl [vmem:[#allocation1 + $0x38] sm:$0xff pattern:$0x73625140]
  %886 = vst [vmem:[#allocation1] ss:$4 sm:$0xff] %v683
  %887 = vst [vmem:[%s756] ss:$4 sm:$0xff] %v684
  %v888 = vld.sshfl [vmem:[#allocation1] sm:$0xff pattern:$0x73625140]
  %v889 = vld.sshfl [vmem:[#allocation1 + $0x8] sm:$0xff pattern:$0x73625140]
  %v890 = vld.sshfl [vmem:[#allocation1 + $0x10] sm:$0xff pattern:$0x73625140]
  %v891 = vld.sshfl [vmem:[#allocation1 + $0x18] sm:$0xff pattern:$0x73625140]
  %v892 = vld.sshfl [vmem:[#allocation1 + $0x20] sm:$0xff pattern:$0x73625140]
  %v893 = vld.sshfl [vmem:[#allocation1 + $0x28] sm:$0xff pattern:$0x73625140]
  %v894 = vld.sshfl [vmem:[#allocation1 + $0x30] sm:$0xff pattern:$0x73625140]
  %v895 = vld.sshfl [vmem:[#allocation1 + $0x38] sm:$0xff pattern:$0x73625140]
  %896 = vst [vmem:[#allocation1] ss:$4 sm:$0xff] %v685
  %897 = vst [vmem:[%s756] ss:$4 sm:$0xff] %v686
  %v898 = vld.sshfl [vmem:[#allocation1] sm:$0xff pattern:$0x73625140]
  %v899 = vld.sshfl [vmem:[#allocation1 + $0x8] sm:$0xff pattern:$0x73625140]
  %v900 = vld.sshfl [vmem:[#allocation1 + $0x10] sm:$0xff pattern:$0x73625140]
  %v901 = vld.sshfl [vmem:[#allocation1 + $0x18] sm:$0xff pattern:$0x73625140]
  %v902 = vld.sshfl [vmem:[#allocation1 + $0x20] sm:$0xff pattern:$0x73625140]
  %v903 = vld.sshfl [vmem:[#allocation1 + $0x28] sm:$0xff pattern:$0x73625140]
  %v904 = vld.sshfl [vmem:[#allocation1 + $0x30] sm:$0xff pattern:$0x73625140]
  %v905 = vld.sshfl [vmem:[#allocation1 + $0x38] sm:$0xff pattern:$0x73625140]
  %906 = vst [vmem:[#allocation1] ss:$4 sm:$0xff] %v687
  %907 = vst [vmem:[%s756] ss:$4 sm:$0xff] %v688
  %v908 = vld.sshfl [vmem:[#allocation1] sm:$0xff pattern:$0x73625140]
  %v909 = vld.sshfl [vmem:[#allocation1 + $0x8] sm:$0xff pattern:$0x73625140]
  %v910 = vld.sshfl [vmem:[#allocation1 + $0x10] sm:$0xff pattern:$0x73625140]
  %v911 = vld.sshfl [vmem:[#allocation1 + $0x18] sm:$0xff pattern:$0x73625140]
  %v912 = vld.sshfl [vmem:[#allocation1 + $0x20] sm:$0xff pattern:$0x73625140]
  %v913 = vld.sshfl [vmem:[#allocation1 + $0x28] sm:$0xff pattern:$0x73625140]
  %v914 = vld.sshfl [vmem:[#allocation1 + $0x30] sm:$0xff pattern:$0x73625140]
  %v915 = vld.sshfl [vmem:[#allocation1 + $0x38] sm:$0xff pattern:$0x73625140]
  %916 = vst [vmem:[#allocation1] ss:$4 sm:$0xff] %v689
  %917 = vst [vmem:[%s756] ss:$4 sm:$0xff] %v690
  %v918 = vld.sshfl [vmem:[#allocation1] sm:$0xff pattern:$0x73625140]
  %v919 = vld.sshfl [vmem:[#allocation1 + $0x8] sm:$0xff pattern:$0x73625140]
  %v920 = vld.sshfl [vmem:[#allocation1 + $0x10] sm:$0xff pattern:$0x73625140]
  %v921 = vld.sshfl [vmem:[#allocation1 + $0x18] sm:$0xff pattern:$0x73625140]
  %v922 = vld.sshfl [vmem:[#allocation1 + $0x20] sm:$0xff pattern:$0x73625140]
  %v923 = vld.sshfl [vmem:[#allocation1 + $0x28] sm:$0xff pattern:$0x73625140]
  %v924 = vld.sshfl [vmem:[#allocation1 + $0x30] sm:$0xff pattern:$0x73625140]
  %v925 = vld.sshfl [vmem:[#allocation1 + $0x38] sm:$0xff pattern:$0x73625140]
  %926 = vst [vmem:[#allocation1] ss:$4 sm:$0xff] %v691
  %927 = vst [vmem:[%s756] ss:$4 sm:$0xff] %v692
  %v928 = vld.sshfl [vmem:[#allocation1] sm:$0xff pattern:$0x73625140]
  %v929 = vld.sshfl [vmem:[#allocation1 + $0x8] sm:$0xff pattern:$0x73625140]
  %v930 = vld.sshfl [vmem:[#allocation1 + $0x10] sm:$0xff pattern:$0x73625140]
  %v931 = vld.sshfl [vmem:[#allocation1 + $0x18] sm:$0xff pattern:$0x73625140]
  %v932 = vld.sshfl [vmem:[#allocation1 + $0x20] sm:$0xff pattern:$0x73625140]
  %v933 = vld.sshfl [vmem:[#allocation1 + $0x28] sm:$0xff pattern:$0x73625140]
  %v934 = vld.sshfl [vmem:[#allocation1 + $0x30] sm:$0xff pattern:$0x73625140]
  %v935 = vld.sshfl [vmem:[#allocation1 + $0x38] sm:$0xff pattern:$0x73625140]
  %936 = vst [vmem:[#allocation1] ss:$4 sm:$0xff] %v693
  %937 = vst [vmem:[%s756] ss:$4 sm:$0xff] %v694
  %v938 = vld.sshfl [vmem:[#allocation1] sm:$0xff pattern:$0x73625140]
  %v939 = vld.sshfl [vmem:[#allocation1 + $0x8] sm:$0xff pattern:$0x73625140]
  %v940 = vld.sshfl [vmem:[#allocation1 + $0x10] sm:$0xff pattern:$0x73625140]
  %v941 = vld.sshfl [vmem:[#allocation1 + $0x18] sm:$0xff pattern:$0x73625140]
  %v942 = vld.sshfl [vmem:[#allocation1 + $0x20] sm:$0xff pattern:$0x73625140]
  %v943 = vld.sshfl [vmem:[#allocation1 + $0x28] sm:$0xff pattern:$0x73625140]
  %v944 = vld.sshfl [vmem:[#allocation1 + $0x30] sm:$0xff pattern:$0x73625140]
  %v945 = vld.sshfl [vmem:[#allocation1 + $0x38] sm:$0xff pattern:$0x73625140]
  %946 = vst [vmem:[#allocation1] ss:$4 sm:$0xff] %v695
  %947 = vst [vmem:[%s756] ss:$4 sm:$0xff] %v696
  %v948 = vld.sshfl [vmem:[#allocation1] sm:$0xff pattern:$0x73625140]
  %v949 = vld.sshfl [vmem:[#allocation1 + $0x8] sm:$0xff pattern:$0x73625140]
  %v950 = vld.sshfl [vmem:[#allocation1 + $0x10] sm:$0xff pattern:$0x73625140]
  %v951 = vld.sshfl [vmem:[#allocation1 + $0x18] sm:$0xff pattern:$0x73625140]
  %v952 = vld.sshfl [vmem:[#allocation1 + $0x20] sm:$0xff pattern:$0x73625140]
  %v953 = vld.sshfl [vmem:[#allocation1 + $0x28] sm:$0xff pattern:$0x73625140]
  %v954 = vld.sshfl [vmem:[#allocation1 + $0x30] sm:$0xff pattern:$0x73625140]
  %v955 = vld.sshfl [vmem:[#allocation1 + $0x38] sm:$0xff pattern:$0x73625140]
  %956 = vst [vmem:[#allocation1] ss:$4 sm:$0xff] %v697
  %957 = vst [vmem:[%s756] ss:$4 sm:$0xff] %v698
  %v958 = vld.sshfl [vmem:[#allocation1] sm:$0xff pattern:$0x73625140]
  %v959 = vld.sshfl [vmem:[#allocation1 + $0x8] sm:$0xff pattern:$0x73625140]
  %v960 = vld.sshfl [vmem:[#allocation1 + $0x10] sm:$0xff pattern:$0x73625140]
  %v961 = vld.sshfl [vmem:[#allocation1 + $0x18] sm:$0xff pattern:$0x73625140]
  %v962 = vld.sshfl [vmem:[#allocation1 + $0x20] sm:$0xff pattern:$0x73625140]
  %v963 = vld.sshfl [vmem:[#allocation1 + $0x28] sm:$0xff pattern:$0x73625140]
  %v964 = vld.sshfl [vmem:[#allocation1 + $0x30] sm:$0xff pattern:$0x73625140]
  %v965 = vld.sshfl [vmem:[#allocation1 + $0x38] sm:$0xff pattern:$0x73625140]
  %966 = vst [vmem:[#allocation1] ss:$4 sm:$0xff] %v699
  %967 = vst [vmem:[%s756] ss:$4 sm:$0xff] %v700
  %v968 = vld.sshfl [vmem:[#allocation1] sm:$0xff pattern:$0x73625140]
  %v969 = vld.sshfl [vmem:[#allocation1 + $0x8] sm:$0xff pattern:$0x73625140]
  %v970 = vld.sshfl [vmem:[#allocation1 + $0x10] sm:$0xff pattern:$0x73625140]
  %v971 = vld.sshfl [vmem:[#allocation1 + $0x18] sm:$0xff pattern:$0x73625140]
  %v972 = vld.sshfl [vmem:[#allocation1 + $0x20] sm:$0xff pattern:$0x73625140]
  %v973 = vld.sshfl [vmem:[#allocation1 + $0x28] sm:$0xff pattern:$0x73625140]
  %v974 = vld.sshfl [vmem:[#allocation1 + $0x30] sm:$0xff pattern:$0x73625140]
  %v975 = vld.sshfl [vmem:[#allocation1 + $0x38] sm:$0xff pattern:$0x73625140]
  %976 = vst [vmem:[#allocation1] ss:$4 sm:$0xff] %v701
  %977 = vst [vmem:[%s756] ss:$4 sm:$0xff] %v702
  %v978 = vld.sshfl [vmem:[#allocation1] sm:$0xff pattern:$0x73625140]
  %v979 = vld.sshfl [vmem:[#allocation1 + $0x8] sm:$0xff pattern:$0x73625140]
  %v980 = vld.sshfl [vmem:[#allocation1 + $0x10] sm:$0xff pattern:$0x73625140]
  %v981 = vld.sshfl [vmem:[#allocation1 + $0x18] sm:$0xff pattern:$0x73625140]
  %v982 = vld.sshfl [vmem:[#allocation1 + $0x20] sm:$0xff pattern:$0x73625140]
  %v983 = vld.sshfl [vmem:[#allocation1 + $0x28] sm:$0xff pattern:$0x73625140]
  %v984 = vld.sshfl [vmem:[#allocation1 + $0x30] sm:$0xff pattern:$0x73625140]
  %v985 = vld.sshfl [vmem:[#allocation1 + $0x38] sm:$0xff pattern:$0x73625140]
  %986 = vst [vmem:[#allocation1] ss:$4 sm:$0xff] %v703
  %987 = vst [vmem:[%s756] ss:$4 sm:$0xff] %v704
  %v988 = vld.sshfl [vmem:[#allocation1] sm:$0xff pattern:$0x73625140]
  %v989 = vld.sshfl [vmem:[#allocation1 + $0x8] sm:$0xff pattern:$0x73625140]
  %v990 = vld.sshfl [vmem:[#allocation1 + $0x10] sm:$0xff pattern:$0x73625140]
  %v991 = vld.sshfl [vmem:[#allocation1 + $0x18] sm:$0xff pattern:$0x73625140]
  %v992 = vld.sshfl [vmem:[#allocation1 + $0x20] sm:$0xff pattern:$0x73625140]
  %v993 = vld.sshfl [vmem:[#allocation1 + $0x28] sm:$0xff pattern:$0x73625140]
  %v994 = vld.sshfl [vmem:[#allocation1 + $0x30] sm:$0xff pattern:$0x73625140]
  %v995 = vld.sshfl [vmem:[#allocation1 + $0x38] sm:$0xff pattern:$0x73625140]
  %996 = vst [vmem:[#allocation1] ss:$4 sm:$0xff] %v705
  %v997 = vld.sshfl [vmem:[#allocation1] sm:$0xff pattern:$0x73625140]
  %v998 = vld.sshfl [vmem:[#allocation1 + $0x8] sm:$0xff pattern:$0x73625140]
  %v999 = vld.sshfl [vmem:[#allocation1 + $0x10] sm:$0xff pattern:$0x73625140]
  %v1000 = vld.sshfl [vmem:[#allocation1 + $0x18] sm:$0xff pattern:$0x73625140]
  %v1197 = vsel %vm458, %v758, 0.0
  %v1198 = vsel %vm458, %v759, 0.0
  %v1199 = vadd.f32 %v1197, %v1198
  %v1200 = vsel %vm458, %v760, 0.0
  %v1201 = vadd.f32 %v1199, %v1200
  %v1202 = vsel %vm458, %v761, 0.0
  %v1203 = vadd.f32 %v1201, %v1202
  %v1204 = vsel %vm458, %v762, 0.0
  %v1205 = vadd.f32 %v1203, %v1204
  %v1206 = vsel %vm458, %v763, 0.0
  %v1207 = vadd.f32 %v1205, %v1206
  %v1208 = vsel %vm458, %v764, 0.0
  %v1209 = vadd.f32 %v1207, %v1208
  %v1210 = vsel %vm458, %v765, 0.0
  %v1211 = vadd.f32 %v1209, %v1210
  %v1212 = vsel %vm458, %v768, 0.0
  %v1213 = vadd.f32 %v1211, %v1212
  %v1214 = vsel %vm458, %v769, 0.0
  %v1215 = vadd.f32 %v1213, %v1214
  %v1216 = vsel %vm458, %v770, 0.0
  %v1217 = vadd.f32 %v1215, %v1216
  %v1218 = vsel %vm458, %v771, 0.0
  %v1219 = vadd.f32 %v1217, %v1218
  %v1220 = vsel %vm458, %v772, 0.0
  %v1221 = vadd.f32 %v1219, %v1220
  %v1222 = vsel %vm458, %v773, 0.0
  %v1223 = vadd.f32 %v1221, %v1222
  %v1224 = vsel %vm458, %v774, 0.0
  %v1225 = vadd.f32 %v1223, %v1224
  %v1226 = vsel %vm458, %v775, 0.0
  %v1227 = vadd.f32 %v1225, %v1226
  %v1228 = vsel %vm458, %v778, 0.0
  %v1229 = vadd.f32 %v1227, %v1228
  %v1230 = vsel %vm458, %v779, 0.0
  %v1231 = vadd.f32 %v1229, %v1230
  %v1232 = vsel %vm458, %v780, 0.0
  %v1233 = vadd.f32 %v1231, %v1232
  %v1234 = vsel %vm458, %v781, 0.0
  %v1235 = vadd.f32 %v1233, %v1234
  %v1236 = vsel %vm458, %v782, 0.0
  %v1237 = vadd.f32 %v1235, %v1236
  %v1238 = vsel %vm458, %v783, 0.0
  %v1239 = vadd.f32 %v1237, %v1238
  %v1240 = vsel %vm458, %v784, 0.0
  %v1241 = vadd.f32 %v1239, %v1240
  %v1242 = vsel %vm458, %v785, 0.0
  %v1243 = vadd.f32 %v1241, %v1242
  %v1244 = vsel %vm458, %v788, 0.0
  %v1245 = vadd.f32 %v1243, %v1244
  %v1246 = vsel %vm458, %v789, 0.0
  %v1247 = vadd.f32 %v1245, %v1246
  %v1248 = vsel %vm458, %v790, 0.0
  %v1249 = vadd.f32 %v1247, %v1248
  %v1250 = vsel %vm458, %v791, 0.0
  %v1251 = vadd.f32 %v1249, %v1250
  %v1252 = vsel %vm458, %v792, 0.0
  %v1253 = vadd.f32 %v1251, %v1252
  %v1254 = vsel %vm458, %v793, 0.0
  %v1255 = vadd.f32 %v1253, %v1254
  %v1256 = vsel %vm458, %v794, 0.0
  %v1257 = vadd.f32 %v1255, %v1256
  %v1258 = vsel %vm458, %v795, 0.0
  %v1259 = vadd.f32 %v1257, %v1258
  %v1260 = vsel %vm458, %v798, 0.0
  %v1261 = vadd.f32 %v1259, %v1260
  %v1262 = vsel %vm458, %v799, 0.0
  %v1263 = vadd.f32 %v1261, %v1262
  %v1264 = vsel %vm458, %v800, 0.0
  %v1265 = vadd.f32 %v1263, %v1264
  %v1266 = vsel %vm458, %v801, 0.0
  %v1267 = vadd.f32 %v1265, %v1266
  %v1268 = vsel %vm458, %v802, 0.0
  %v1269 = vadd.f32 %v1267, %v1268
  %v1270 = vsel %vm458, %v803, 0.0
  %v1271 = vadd.f32 %v1269, %v1270
  %v1272 = vsel %vm458, %v804, 0.0
  %v1273 = vadd.f32 %v1271, %v1272
  %v1274 = vsel %vm458, %v805, 0.0
  %v1275 = vadd.f32 %v1273, %v1274
  %v1276 = vsel %vm458, %v808, 0.0
  %v1277 = vadd.f32 %v1275, %v1276
  %v1278 = vsel %vm458, %v809, 0.0
  %v1279 = vadd.f32 %v1277, %v1278
  %v1280 = vsel %vm458, %v810, 0.0
  %v1281 = vadd.f32 %v1279, %v1280
  %v1282 = vsel %vm458, %v811, 0.0
  %v1283 = vadd.f32 %v1281, %v1282
  %v1284 = vsel %vm458, %v812, 0.0
  %v1285 = vadd.f32 %v1283, %v1284
  %v1286 = vsel %vm458, %v813, 0.0
  %v1287 = vadd.f32 %v1285, %v1286
  %v1288 = vsel %vm458, %v814, 0.0
  %v1289 = vadd.f32 %v1287, %v1288
  %v1290 = vsel %vm458, %v815, 0.0
  %v1291 = vadd.f32 %v1289, %v1290
  %v1292 = vsel %vm458, %v818, 0.0
  %v1293 = vadd.f32 %v1291, %v1292
  %v1294 = vsel %vm458, %v819, 0.0
  %v1295 = vadd.f32 %v1293, %v1294
  %v1296 = vsel %vm458, %v820, 0.0
  %v1297 = vadd.f32 %v1295, %v1296
  %v1298 = vsel %vm458, %v821, 0.0
  %v1299 = vadd.f32 %v1297, %v1298
  %v1300 = vsel %vm458, %v822, 0.0
  %v1301 = vadd.f32 %v1299, %v1300
  %v1302 = vsel %vm458, %v823, 0.0
  %v1303 = vadd.f32 %v1301, %v1302
  %v1304 = vsel %vm458, %v824, 0.0
  %v1305 = vadd.f32 %v1303, %v1304
  %v1306 = vsel %vm458, %v825, 0.0
  %v1307 = vadd.f32 %v1305, %v1306
  %v1308 = vsel %vm458, %v828, 0.0
  %v1309 = vadd.f32 %v1307, %v1308
  %v1310 = vsel %vm458, %v829, 0.0
  %v1311 = vadd.f32 %v1309, %v1310
  %v1312 = vsel %vm458, %v830, 0.0
  %v1313 = vadd.f32 %v1311, %v1312
  %v1314 = vsel %vm458, %v831, 0.0
  %v1315 = vadd.f32 %v1313, %v1314
  %v1316 = vsel %vm458, %v832, 0.0
  %v1317 = vadd.f32 %v1315, %v1316
  %v1318 = vsel %vm458, %v833, 0.0
  %v1319 = vadd.f32 %v1317, %v1318
  %v1320 = vsel %vm458, %v834, 0.0
  %v1321 = vadd.f32 %v1319, %v1320
  %v1322 = vsel %vm458, %v835, 0.0
  %v1323 = vadd.f32 %v1321, %v1322
  %v1324 = vsel %vm458, %v838, 0.0
  %v1325 = vadd.f32 %v1323, %v1324
  %v1326 = vsel %vm458, %v839, 0.0
  %v1327 = vadd.f32 %v1325, %v1326
  %v1328 = vsel %vm458, %v840, 0.0
  %v1329 = vadd.f32 %v1327, %v1328
  %v1330 = vsel %vm458, %v841, 0.0
  %v1331 = vadd.f32 %v1329, %v1330
  %v1332 = vsel %vm458, %v842, 0.0
  %v1333 = vadd.f32 %v1331, %v1332
  %v1334 = vsel %vm458, %v843, 0.0
  %v1335 = vadd.f32 %v1333, %v1334
  %v1336 = vsel %vm458, %v844, 0.0
  %v1337 = vadd.f32 %v1335, %v1336
  %v1338 = vsel %vm458, %v845, 0.0
  %v1339 = vadd.f32 %v1337, %v1338
  %v1340 = vsel %vm458, %v848, 0.0
  %v1341 = vadd.f32 %v1339, %v1340
  %v1342 = vsel %vm458, %v849, 0.0
  %v1343 = vadd.f32 %v1341, %v1342
  %v1344 = vsel %vm458, %v850, 0.0
  %v1345 = vadd.f32 %v1343, %v1344
  %v1346 = vsel %vm458, %v851, 0.0
  %v1347 = vadd.f32 %v1345, %v1346
  %v1348 = vsel %vm458, %v852, 0.0
  %v1349 = vadd.f32 %v1347, %v1348
  %v1350 = vsel %vm458, %v853, 0.0
  %v1351 = vadd.f32 %v1349, %v1350
  %v1352 = vsel %vm458, %v854, 0.0
  %v1353 = vadd.f32 %v1351, %v1352
  %v1354 = vsel %vm458, %v855, 0.0
  %v1355 = vadd.f32 %v1353, %v1354
  %v1356 = vsel %vm458, %v858, 0.0
  %v1357 = vadd.f32 %v1355, %v1356
  %v1358 = vsel %vm458, %v859, 0.0
  %v1359 = vadd.f32 %v1357, %v1358
  %v1360 = vsel %vm458, %v860, 0.0
  %v1361 = vadd.f32 %v1359, %v1360
  %v1362 = vsel %vm458, %v861, 0.0
  %v1363 = vadd.f32 %v1361, %v1362
  %v1364 = vsel %vm458, %v862, 0.0
  %v1365 = vadd.f32 %v1363, %v1364
  %v1366 = vsel %vm458, %v863, 0.0
  %v1367 = vadd.f32 %v1365, %v1366
  %v1368 = vsel %vm458, %v864, 0.0
  %v1369 = vadd.f32 %v1367, %v1368
  %v1370 = vsel %vm458, %v865, 0.0
  %v1371 = vadd.f32 %v1369, %v1370
  %v1372 = vsel %vm458, %v868, 0.0
  %v1373 = vadd.f32 %v1371, %v1372
  %v1374 = vsel %vm458, %v869, 0.0
  %v1375 = vadd.f32 %v1373, %v1374
  %v1376 = vsel %vm458, %v870, 0.0
  %v1377 = vadd.f32 %v1375, %v1376
  %v1378 = vsel %vm458, %v871, 0.0
  %v1379 = vadd.f32 %v1377, %v1378
  %v1380 = vsel %vm458, %v872, 0.0
  %v1381 = vadd.f32 %v1379, %v1380
  %v1382 = vsel %vm458, %v873, 0.0
  %v1383 = vadd.f32 %v1381, %v1382
  %v1384 = vsel %vm458, %v874, 0.0
  %v1385 = vadd.f32 %v1383, %v1384
  %v1386 = vsel %vm458, %v875, 0.0
  %v1387 = vadd.f32 %v1385, %v1386
  %v1388 = vsel %vm458, %v878, 0.0
  %v1389 = vadd.f32 %v1387, %v1388
  %v1390 = vsel %vm458, %v879, 0.0
  %v1391 = vadd.f32 %v1389, %v1390
  %v1392 = vsel %vm458, %v880, 0.0
  %v1393 = vadd.f32 %v1391, %v1392
  %v1394 = vsel %vm458, %v881, 0.0
  %v1395 = vadd.f32 %v1393, %v1394
  %v1396 = vsel %vm458, %v882, 0.0
  %v1397 = vadd.f32 %v1395, %v1396
  %v1398 = vsel %vm458, %v883, 0.0
  %v1399 = vadd.f32 %v1397, %v1398
  %v1400 = vsel %vm458, %v884, 0.0
  %v1401 = vadd.f32 %v1399, %v1400
  %v1402 = vsel %vm458, %v885, 0.0
  %v1403 = vadd.f32 %v1401, %v1402
  %v1404 = vsel %vm458, %v888, 0.0
  %v1405 = vadd.f32 %v1403, %v1404
  %v1406 = vsel %vm458, %v889, 0.0
  %v1407 = vadd.f32 %v1405, %v1406
  %v1408 = vsel %vm458, %v890, 0.0
  %v1409 = vadd.f32 %v1407, %v1408
  %v1410 = vsel %vm458, %v891, 0.0
  %v1411 = vadd.f32 %v1409, %v1410
  %v1412 = vsel %vm458, %v892, 0.0
  %v1413 = vadd.f32 %v1411, %v1412
  %v1414 = vsel %vm458, %v893, 0.0
  %v1415 = vadd.f32 %v1413, %v1414
  %v1416 = vsel %vm458, %v894, 0.0
  %v1417 = vadd.f32 %v1415, %v1416
  %v1418 = vsel %vm458, %v895, 0.0
  %v1419 = vadd.f32 %v1417, %v1418
  %v1420 = vsel %vm458, %v898, 0.0
  %v1421 = vadd.f32 %v1419, %v1420
  %v1422 = vsel %vm458, %v899, 0.0
  %v1423 = vadd.f32 %v1421, %v1422
  %v1424 = vsel %vm458, %v900, 0.0
  %v1425 = vadd.f32 %v1423, %v1424
  %v1426 = vsel %vm458, %v901, 0.0
  %v1427 = vadd.f32 %v1425, %v1426
  %v1428 = vsel %vm458, %v902, 0.0
  %v1429 = vadd.f32 %v1427, %v1428
  %v1430 = vsel %vm458, %v903, 0.0
  %v1431 = vadd.f32 %v1429, %v1430
  %v1432 = vsel %vm458, %v904, 0.0
  %v1433 = vadd.f32 %v1431, %v1432
  %v1434 = vsel %vm458, %v905, 0.0
  %v1435 = vadd.f32 %v1433, %v1434
  %v1436 = vsel %vm458, %v908, 0.0
  %v1437 = vadd.f32 %v1435, %v1436
  %v1438 = vsel %vm458, %v909, 0.0
  %v1439 = vadd.f32 %v1437, %v1438
  %v1440 = vsel %vm458, %v910, 0.0
  %v1441 = vadd.f32 %v1439, %v1440
  %v1442 = vsel %vm458, %v911, 0.0
  %v1443 = vadd.f32 %v1441, %v1442
  %v1444 = vsel %vm458, %v912, 0.0
  %v1445 = vadd.f32 %v1443, %v1444
  %v1446 = vsel %vm458, %v913, 0.0
  %v1447 = vadd.f32 %v1445, %v1446
  %v1448 = vsel %vm458, %v914, 0.0
  %v1449 = vadd.f32 %v1447, %v1448
  %v1450 = vsel %vm458, %v915, 0.0
  %v1451 = vadd.f32 %v1449, %v1450
  %v1452 = vsel %vm458, %v918, 0.0
  %v1453 = vadd.f32 %v1451, %v1452
  %v1454 = vsel %vm458, %v919, 0.0
  %v1455 = vadd.f32 %v1453, %v1454
  %v1456 = vsel %vm458, %v920, 0.0
  %v1457 = vadd.f32 %v1455, %v1456
  %v1458 = vsel %vm458, %v921, 0.0
  %v1459 = vadd.f32 %v1457, %v1458
  %v1460 = vsel %vm458, %v922, 0.0
  %v1461 = vadd.f32 %v1459, %v1460
  %v1462 = vsel %vm458, %v923, 0.0
  %v1463 = vadd.f32 %v1461, %v1462
  %v1464 = vsel %vm458, %v924, 0.0
  %v1465 = vadd.f32 %v1463, %v1464
  %v1466 = vsel %vm458, %v925, 0.0
  %v1467 = vadd.f32 %v1465, %v1466
  %v1468 = vsel %vm458, %v928, 0.0
  %v1469 = vadd.f32 %v1467, %v1468
  %v1470 = vsel %vm458, %v929, 0.0
  %v1471 = vadd.f32 %v1469, %v1470
  %v1472 = vsel %vm458, %v930, 0.0
  %v1473 = vadd.f32 %v1471, %v1472
  %v1474 = vsel %vm458, %v931, 0.0
  %v1475 = vadd.f32 %v1473, %v1474
  %v1476 = vsel %vm458, %v932, 0.0
  %v1477 = vadd.f32 %v1475, %v1476
  %v1478 = vsel %vm458, %v933, 0.0
  %v1479 = vadd.f32 %v1477, %v1478
  %v1480 = vsel %vm458, %v934, 0.0
  %v1481 = vadd.f32 %v1479, %v1480
  %v1482 = vsel %vm458, %v935, 0.0
  %v1483 = vadd.f32 %v1481, %v1482
  %v1484 = vsel %vm458, %v938, 0.0
  %v1485 = vadd.f32 %v1483, %v1484
  %v1486 = vsel %vm458, %v939, 0.0
  %v1487 = vadd.f32 %v1485, %v1486
  %v1488 = vsel %vm458, %v940, 0.0
  %v1489 = vadd.f32 %v1487, %v1488
  %v1490 = vsel %vm458, %v941, 0.0
  %v1491 = vadd.f32 %v1489, %v1490
  %v1492 = vsel %vm458, %v942, 0.0
  %v1493 = vadd.f32 %v1491, %v1492
  %v1494 = vsel %vm458, %v943, 0.0
  %v1495 = vadd.f32 %v1493, %v1494
  %v1496 = vsel %vm458, %v944, 0.0
  %v1497 = vadd.f32 %v1495, %v1496
  %v1498 = vsel %vm458, %v945, 0.0
  %v1499 = vadd.f32 %v1497, %v1498
  %v1500 = vsel %vm458, %v948, 0.0
  %v1501 = vadd.f32 %v1499, %v1500
  %v1502 = vsel %vm458, %v949, 0.0
  %v1503 = vadd.f32 %v1501, %v1502
  %v1504 = vsel %vm458, %v950, 0.0
  %v1505 = vadd.f32 %v1503, %v1504
  %v1506 = vsel %vm458, %v951, 0.0
  %v1507 = vadd.f32 %v1505, %v1506
  %v1508 = vsel %vm458, %v952, 0.0
  %v1509 = vadd.f32 %v1507, %v1508
  %v1510 = vsel %vm458, %v953, 0.0
  %v1511 = vadd.f32 %v1509, %v1510
  %v1512 = vsel %vm458, %v954, 0.0
  %v1513 = vadd.f32 %v1511, %v1512
  %v1514 = vsel %vm458, %v955, 0.0
  %v1515 = vadd.f32 %v1513, %v1514
  %v1516 = vsel %vm458, %v958, 0.0
  %v1517 = vadd.f32 %v1515, %v1516
  %v1518 = vsel %vm458, %v959, 0.0
  %v1519 = vadd.f32 %v1517, %v1518
  %v1520 = vsel %vm458, %v960, 0.0
  %v1521 = vadd.f32 %v1519, %v1520
  %v1522 = vsel %vm458, %v961, 0.0
  %v1523 = vadd.f32 %v1521, %v1522
  %v1524 = vsel %vm458, %v962, 0.0
  %v1525 = vadd.f32 %v1523, %v1524
  %v1526 = vsel %vm458, %v963, 0.0
  %v1527 = vadd.f32 %v1525, %v1526
  %v1528 = vsel %vm458, %v964, 0.0
  %v1529 = vadd.f32 %v1527, %v1528
  %v1530 = vsel %vm458, %v965, 0.0
  %v1531 = vadd.f32 %v1529, %v1530
  %v1532 = vsel %vm458, %v968, 0.0
  %v1533 = vadd.f32 %v1531, %v1532
  %v1534 = vsel %vm458, %v969, 0.0
  %v1535 = vadd.f32 %v1533, %v1534
  %v1536 = vsel %vm458, %v970, 0.0
  %v1537 = vadd.f32 %v1535, %v1536
  %v1538 = vsel %vm458, %v971, 0.0
  %v1539 = vadd.f32 %v1537, %v1538
  %v1540 = vsel %vm458, %v972, 0.0
  %v1541 = vadd.f32 %v1539, %v1540
  %v1542 = vsel %vm458, %v973, 0.0
  %v1543 = vadd.f32 %v1541, %v1542
  %v1544 = vsel %vm458, %v974, 0.0
  %v1545 = vadd.f32 %v1543, %v1544
  %v1546 = vsel %vm458, %v975, 0.0
  %v1547 = vadd.f32 %v1545, %v1546
  %v1548 = vsel %vm458, %v978, 0.0
  %v1549 = vadd.f32 %v1547, %v1548
  %v1550 = vsel %vm458, %v979, 0.0
  %v1551 = vadd.f32 %v1549, %v1550
  %v1552 = vsel %vm458, %v980, 0.0
  %v1553 = vadd.f32 %v1551, %v1552
  %v1554 = vsel %vm458, %v981, 0.0
  %v1555 = vadd.f32 %v1553, %v1554
  %v1556 = vsel %vm458, %v982, 0.0
  %v1557 = vadd.f32 %v1555, %v1556
  %v1558 = vsel %vm458, %v983, 0.0
  %v1559 = vadd.f32 %v1557, %v1558
  %v1560 = vsel %vm458, %v984, 0.0
  %v1561 = vadd.f32 %v1559, %v1560
  %v1562 = vsel %vm458, %v985, 0.0
  %v1563 = vadd.f32 %v1561, %v1562
  %v1564 = vsel %vm458, %v988, 0.0
  %v1565 = vadd.f32 %v1563, %v1564
  %v1566 = vsel %vm458, %v989, 0.0
  %v1567 = vadd.f32 %v1565, %v1566
  %v1568 = vsel %vm458, %v990, 0.0
  %v1569 = vadd.f32 %v1567, %v1568
  %v1570 = vsel %vm458, %v991, 0.0
  %v1571 = vadd.f32 %v1569, %v1570
  %v1572 = vsel %vm458, %v992, 0.0
  %v1573 = vadd.f32 %v1571, %v1572
  %v1574 = vsel %vm458, %v993, 0.0
  %v1575 = vadd.f32 %v1573, %v1574
  %v1576 = vsel %vm458, %v994, 0.0
  %v1577 = vadd.f32 %v1575, %v1576
  %v1578 = vsel %vm458, %v995, 0.0
  %v1579 = vadd.f32 %v1577, %v1578
  %v1580 = vsel %vm458, %v997, 0.0
  %v1581 = vadd.f32 %v1579, %v1580
  %v1582 = vsel %vm458, %v998, 0.0
  %v1583 = vadd.f32 %v1581, %v1582
  %v1584 = vsel %vm458, %v999, 0.0
  %v1585 = vadd.f32 %v1583, %v1584
  %v1586 = vsel %vm458, %v1000, 0.0
  %v1587 = vadd.f32 %v1585, %v1586
  %1588 = vadd.xlane.f32.xlu0 %v1587
  %v1589 = vpop.xlane.xlu0 %1588
  %v1590 = vld [vmem:[#allocation2] sm:$0x1]
  %v1592 = vperm.slane %v1590, 0
  %v1594 = vadd.f32 %v1589, %v1592
  %vm1595 = vcmask 1024
  %1596 = vst.msk [vmem:[%s3] sm:$0x3] %vm1595, %v1594
  // Predicated region
  $region14: #{network_head.1} parent=0 // pred_check
    _
  $region15: #{network_head.1} parent=0 // pred_check_branch
    %1598 = sbr.rel (0) target = $region17
  $region16: #{network_head.1} parent=0 // pred_region
    _
  $region17: #{network_head.1} parent=0 // pred_fallthru
    _
  // Predicated region
  $region18: #{network_head.1} parent=0 // pred_check
    _
  $region19: #{network_head.1} parent=0 // pred_check_branch
    %1600 = sbr.rel (0) target = $region21
  $region20: #{network_head.1} parent=0 // pred_region
    _
  $region21: #{network_head.1} parent=0 // pred_fallthru
    _

</llo_original>
